<compile_context>
chip_gen: v5e
topology: v5e:2x2
jax: 0.10.0
libtpu: 0.0.40
codegen_flags: <defaults>
</compile_context>

<pallas_src>
import functools
import math

import jax
import jax.numpy as jnp
from jax.experimental import pallas as pl
from jax.experimental.pallas import tpu as pltpu


def _se_kernel(x_ref, w1_ref, w2_ref, o_ref, *, inv_hw):
    """One grid step == B_TILE batch images.

    x_ref : (BT, C, HW)  activation block
    w1_ref: (Cr, C)      first Linear weight (native PyTorch layout)
    w2_ref: (C, Cr)      second Linear weight (native PyTorch layout)
    o_ref : (BT, C, HW)  output block
    """
    x = x_ref[...]                                                  # (BT, C, HW)

    # Global average pool over H*W. Widen to f32 inside the reduce; no
    # explicit full-block f32 copy for sub-32-bit inputs.
    pooled = jnp.sum(x, axis=-1, dtype=jnp.float32) * inv_hw        # (BT, C)

    w1 = w1_ref[...].astype(jnp.float32)                            # (Cr, C)
    w2 = w2_ref[...].astype(jnp.float32)                            # (C, Cr)

    # FC1 + ReLU: h[b, j] = relu( sum_c pooled[b, c] * W1[j, c] )
    # Contraction along the lane (minor) axis -> XLU lane reduce.
    h = jnp.maximum(
        jnp.sum(pooled[:, None, :] * w1[None, :, :], axis=-1), 0.0)  # (BT, Cr)

    # FC2: g[b, c] = sum_j h[b, j] * W2[c, j]
    g = jnp.sum(h[:, None, :] * w2[None, :, :], axis=-1)            # (BT, C)
    # TODO(synk): for large-C configs (C >= 256), switch the two FCs to MXU
    # dots if profiling shows this gate step on the critical path.

    # Hsigmoid gate: relu6(g + 3) / 6
    scale = jnp.clip(g + 3.0, 0.0, 6.0) * (1.0 / 6.0)               # (BT, C)

    # Channel-wise rescale of the activations (lane-dense full-block store).
    o_ref[...] = x * scale[:, :, None].astype(x.dtype)


def _vmem_capacity_bytes():
    """Physical VMEM of the local TPU, with a conservative fallback."""
    try:
        info = pltpu.get_tpu_info()
        cap = getattr(info, "vmem_capacity_bytes", None)
        if cap:
            return int(cap)
    except Exception:
        pass
    return 64 << 20  # smallest across v5e / v6e / v7x


def _pick_batch_tile(B, slab_bytes, target_bytes):
    """Largest divisor of B such that the activation block stays under
    target_bytes and (when B >= 2) the grid keeps >= 2 steps so both v7x
    TensorCores are used. Falls back to 1."""
    if B <= 1:
        return 1
    best = 1
    for d in range(1, B + 1):
        if B % d:
            continue
        if d * slab_bytes > target_bytes:
            continue
        if B // d < 2:          # keep >= 2 parallel grid steps (v7x megacore)
            continue
        best = d
    return best


def se_module(x, w1, w2, *, block_bytes_target=4 << 20):
    """SEModule forward pass.

    x  : (B, C, H, W) activations (NCHW, like PyTorch)
    w1 : (C//r, C)    nn.Linear(channel, channel//reduction, bias=False).weight
    w2 : (C, C//r)    nn.Linear(channel//reduction, channel, bias=False).weight
    """
    B, C, H, W = x.shape
    HW = H * W
    Cr = w1.shape[0]
    assert w1.shape == (Cr, C), "w1 must be (C//reduction, C)"
    assert w2.shape == (C, Cr), "w2 must be (C, C//reduction)"

    # TODO(synk): if HW is not a multiple of 128 (e.g. 14x14=196) stores lower
    # to masked vst.msk; for production shapes fold/pad the minor dim to a
    # 128-multiple in the wrapper to keep the store path lane-dense.

    x3 = x.reshape(B, C, HW)     # contiguous reshape: free (no HBM copy)

    slab_bytes = C * HW * x.dtype.itemsize
    bt = _pick_batch_tile(B, slab_bytes, block_bytes_target)
    grid_b = B // bt

    inv_hw = 1.0 / float(HW)
    kernel = functools.partial(_se_kernel, inv_hw=inv_hw)

    # VMEM budget: in + out blocks double-buffered (~4x block), double-buffered
    # weights, small f32 gate temporaries, plus Mosaic internal scratch.
    w_bytes = 2 * Cr * C * w1.dtype.itemsize
    vmem_need = (4 * bt * slab_bytes        # in/out, double-buffered
                 + 4 * w_bytes              # weights (buffers + f32 copies)
                 + 8 * bt * (C + Cr) * 4    # pooled / h / g / scale temporaries
                 + (2 << 20))               # headroom for internal scratch
    vmem_cap = _vmem_capacity_bytes() - (8 << 20)   # leave headroom for Mosaic
    vmem_limit = int(min(max(vmem_need, 16 << 20), vmem_cap))
    # TODO(synk): if a single (C, HW) image slab cannot fit even un-batched
    # (4*slab_bytes > vmem_cap), switch to a resident-input / HW-tiled-output
    # two-level grid instead of this single-pass path.

    out3 = pl.pallas_call(
        kernel,
        out_shape=jax.ShapeDtypeStruct((B, C, HW), x.dtype),
        grid_spec=pltpu.PrefetchScalarGridSpec(
            num_scalar_prefetch=0,
            grid=(grid_b,),
            in_specs=[
                pl.BlockSpec((bt, C, HW), lambda b: (b, 0, 0)),
                pl.BlockSpec((Cr, C), lambda b: (0, 0)),
                pl.BlockSpec((C, Cr), lambda b: (0, 0)),
            ],
            out_specs=pl.BlockSpec((bt, C, HW), lambda b: (b, 0, 0)),
        ),
        compiler_params=pltpu.CompilerParams(
            dimension_semantics=("parallel",),
            vmem_limit_bytes=vmem_limit,
        ),
    )(x3, w1, w2)

    return out3.reshape(B, C, H, W)


def _se_ref(x, w1, w2):
    """Pure-JAX reference matching the PyTorch SEModule forward."""
    y = jnp.mean(x, axis=(2, 3))                       # (B, C)  adaptive avg pool
    y = jnp.maximum(y @ w1.T, 0.0)                     # (B, Cr) Linear + ReLU
    y = y @ w2.T                                       # (B, C)  Linear
    y = jnp.clip(y + 3.0, 0.0, 6.0) / 6.0              # hsigmoid
    return x * y[:, :, None, None]


if __name__ == "__main__":
    key = jax.random.PRNGKey(0)
    k1, k2, k3 = jax.random.split(key, 3)

    B, C, H, W = 2, 8, 16, 16
    reduction = 4
    Cr = C // reduction

    x = jax.random.normal(k1, (B, C, H, W), dtype=jnp.float32) * 2.0
    w1 = jax.random.normal(k2, (Cr, C), dtype=jnp.float32) * (1.0 / math.sqrt(C))
    w2 = jax.random.normal(k3, (C, Cr), dtype=jnp.float32) * (1.0 / math.sqrt(Cr))

    y = se_module(x, w1, w2)
    jax.block_until_ready(y)

    y_ref = _se_ref(x, w1, w2)
    assert y.shape == x.shape and y.dtype == x.dtype
    assert jnp.allclose(y, y_ref, atol=1e-5, rtol=1e-5), "mismatch vs reference"

    print("KERNEL_OK")
</pallas_src>

<mosaic_0001>
module attributes {stable_mosaic.version = 11 : i64} {
  func.func @_se_kernel(%arg0: i32, %arg1: memref<1x8x256xf32, #tpu.memory_space<vmem>>, %arg2: memref<2x8xf32, #tpu.memory_space<vmem>>, %arg3: memref<8x2xf32, #tpu.memory_space<vmem>>, %arg4: memref<1x8x256xf32, #tpu.memory_space<vmem>>) attributes {dimension_semantics = [#tpu.dimension_semantics<parallel>], iteration_bounds = array<i64: 2>, scalar_prefetch = 0 : i64, scratch_operands = 0 : i64, tpu.core_type = #tpu.core_type<tc>, window_params = [{transform_indices = @transform_0, window_bounds = array<i64: 1, 8, 256>}, {pipeline_mode = #tpu.pipeline_mode<synchronous>, transform_indices = @transform_1, window_bounds = array<i64: 2, 8>}, {pipeline_mode = #tpu.pipeline_mode<synchronous>, transform_indices = @transform_2, window_bounds = array<i64: 8, 2>}, {transform_indices = @transform_3, window_bounds = array<i64: 1, 8, 256>}]} {
    %c0 = arith.constant 0 : index
    %c0_0 = arith.constant 0 : index
    %c0_1 = arith.constant 0 : index
    %0 = vector.load %arg1[%c0, %c0_0, %c0_1] : memref<1x8x256xf32, #tpu.memory_space<vmem>>, vector<1x8x256xf32>
    %cst = arith.constant dense<0.000000e+00> : vector<1x8xf32>
    %1 = vector.multi_reduction <add>, %0, %cst [2] : vector<1x8x256xf32> to vector<1x8xf32>
    %cst_2 = arith.constant 3.906250e-03 : f32
    %2 = vector.broadcast %cst_2 : f32 to vector<1x8xf32>
    %3 = arith.mulf %1, %2 : vector<1x8xf32>
    %c0_3 = arith.constant 0 : index
    %c0_4 = arith.constant 0 : index
    %4 = vector.load %arg2[%c0_3, %c0_4] : memref<2x8xf32, #tpu.memory_space<vmem>>, vector<2x8xf32>
    %c0_5 = arith.constant 0 : index
    %c0_6 = arith.constant 0 : index
    %5 = vector.load %arg3[%c0_5, %c0_6] : memref<8x2xf32, #tpu.memory_space<vmem>>, vector<8x2xf32>
    %6 = vector.shape_cast %3 : vector<1x8xf32> to vector<1x1x8xf32>
    %7 = vector.shape_cast %4 : vector<2x8xf32> to vector<1x2x8xf32>
    %8 = vector.broadcast %6 : vector<1x1x8xf32> to vector<1x2x8xf32>
    %9 = arith.mulf %8, %7 : vector<1x2x8xf32>
    %cst_7 = arith.constant dense<0.000000e+00> : vector<1x2xf32>
    %10 = vector.multi_reduction <add>, %9, %cst_7 [2] : vector<1x2x8xf32> to vector<1x2xf32>
    %cst_8 = arith.constant 0.000000e+00 : f32
    %11 = vector.broadcast %cst_8 : f32 to vector<1x2xf32>
    %12 = arith.maximumf %10, %11 : vector<1x2xf32>
    %13 = vector.shape_cast %12 : vector<1x2xf32> to vector<1x1x2xf32>
    %14 = vector.shape_cast %5 : vector<8x2xf32> to vector<1x8x2xf32>
    %15 = vector.broadcast %13 : vector<1x1x2xf32> to vector<1x8x2xf32>
    %16 = arith.mulf %15, %14 : vector<1x8x2xf32>
    %cst_9 = arith.constant dense<0.000000e+00> : vector<1x8xf32>
    %17 = vector.multi_reduction <add>, %16, %cst_9 [2] : vector<1x8x2xf32> to vector<1x8xf32>
    %cst_10 = arith.constant 3.000000e+00 : f32
    %18 = vector.broadcast %cst_10 : f32 to vector<1x8xf32>
    %19 = arith.addf %17, %18 : vector<1x8xf32>
    %cst_11 = arith.constant 0.000000e+00 : f32
    %cst_12 = arith.constant 6.000000e+00 : f32
    %20 = vector.broadcast %cst_11 : f32 to vector<1x8xf32>
    %21 = arith.maximumf %20, %19 : vector<1x8xf32>
    %22 = vector.broadcast %cst_12 : f32 to vector<1x8xf32>
    %23 = arith.minimumf %22, %21 : vector<1x8xf32>
    %cst_13 = arith.constant 0.166666672 : f32
    %24 = vector.broadcast %cst_13 : f32 to vector<1x8xf32>
    %25 = arith.mulf %23, %24 : vector<1x8xf32>
    %26 = vector.shape_cast %25 : vector<1x8xf32> to vector<1x8x1xf32>
    %27 = vector.broadcast %26 : vector<1x8x1xf32> to vector<1x8x256xf32>
    %28 = arith.mulf %0, %27 : vector<1x8x256xf32>
    %c0_14 = arith.constant 0 : index
    %c0_15 = arith.constant 0 : index
    %c0_16 = arith.constant 0 : index
    %29 = vector.load %arg4[%c0_14, %c0_15, %c0_16] : memref<1x8x256xf32, #tpu.memory_space<vmem>>, vector<1x8x256xf32>
    tpu.vector_store %arg4[%c0_14, %c0_15, %c0_16], %28 {strides = array<i32>} : memref<1x8x256xf32, #tpu.memory_space<vmem>>, vector<1x8x256xf32>,
    return
  }
  func.func @transform_0(%arg0: i32) -> (i32, i32, i32) {
    %c0_i32 = arith.constant 0 : i32
    %c0_i32_0 = arith.constant 0 : i32
    %c0_i32_1 = arith.constant 0 : i32
    return %arg0, %c0_i32, %c0_i32_0 : i32, i32, i32
  }
  func.func @transform_1(%arg0: i32) -> (i32, i32) {
    %c0_i32 = arith.constant 0 : i32
    %c0_i32_0 = arith.constant 0 : i32
    %c0_i32_1 = arith.constant 0 : i32
    return %c0_i32, %c0_i32_0 : i32, i32
  }
  func.func @transform_2(%arg0: i32) -> (i32, i32) {
    %c0_i32 = arith.constant 0 : i32
    %c0_i32_0 = arith.constant 0 : i32
    %c0_i32_1 = arith.constant 0 : i32
    return %c0_i32, %c0_i32_0 : i32, i32
  }
  func.func @transform_3(%arg0: i32) -> (i32, i32, i32) {
    %c0_i32 = arith.constant 0 : i32
    %c0_i32_0 = arith.constant 0 : i32
    %c0_i32_1 = arith.constant 0 : i32
    return %arg0, %c0_i32, %c0_i32_0 : i32, i32, i32
  }
}

</mosaic_0001>

<llo_original>
// kernel: tpu_custom_call.1
$region0: #{tpu_custom_call.1}
  #allocation0 [shape = 'u32[]', space=smem, size = 0x4, offset = 0x4, fixed_abs, tag = 'smem constant byte address 0x4 - core index']
  #allocation1 [shape = 'u32[72,128]{1,0:T(1,128)}', space=vmem, size = 0x9000, scoped, tag = 'internal scratch']
  %s0 = inlined_call_operand.hbm [shape: f32[2,8,256], index: 0, kind: input, shape index: {}]
  %s1 = inlined_call_operand.vmem [shape: f32[2,8], index: 1, kind: input, shape index: {}]
  %s2 = inlined_call_operand.vmem [shape: f32[8,2], index: 2, kind: input, shape index: {}]
  %s3 = inlined_call_operand.hbm [shape: f32[2,8,256], index: 3, kind: output, shape index: {}]
  %s4 = sld [smem:[#allocation0]]
  $region49: #{tpu_custom_call.1} parent=0
    _
  %s6 = ssub.s32 1, %s4
  %s7 = scalar_select 0, %s6, %s4
  $region1: #{tpu_custom_call.1} parent=0
    #allocation2 [shape = 'u8[16384]{0}', space=vmem, size = 0x4000, scoped, tag = 'input window, operand 0']
    #allocation3 [shape = 's32[2]{0}', space=sflag, size = 0x8, scoped, tag = 'scoped memory for tpu_custom_call.1']
    #allocation4 [shape = 's32[2]{0}', space=sflag, size = 0x8, scoped, tag = 'scoped memory for tpu_custom_call.1']
    #allocation5 [shape = 'u8[16384]{0}', space=vmem, size = 0x4000, scoped, tag = 'output window, operand 0']
    %8 = vsyncpa [#allocation3], 0
    %s9 = scalar_lea.sflag [#allocation3], 1
    %10 = vsyncpa %s9, 0
    %11 = vsyncpa [#allocation4], 0
    %s12 = scalar_lea.sflag [#allocation4], 1
    %13 = vsyncpa %s12, 0
    loop: start=0, step=1, limit=4
    $region2: #{tpu_custom_call.1} parent=1 // loop_pre_header
      _
    $region3: #{tpu_custom_call.1} parent=1 // loop_header
      %s15 = sphi 0, %s19
      %p16 = scmp.ge.s32.totalorder %s15, 4
      %s25 = sphi 0, %s27
      %s28 = sphi 0, %s25
      %s29 = sphi 0, %s28
      %s45 = sphi 0, %s29
      %s49 = sphi 0, %s49
      %s51 = sphi 0, %s49
      %s52 = sphi 0, %s51
      %s66 = sphi 0, %s52
      %s70 = sphi 0, %s70
      %s72 = sphi 0, %s70
      %s73 = sphi 0, %s72
      %s87 = sphi 0, %s73
      %s93 = sphi 0, %s95
      %s96 = sphi 0, %s93
      %s97 = sphi 0, %s96
      %s113 = sphi 0, %s97
    $region4: #{tpu_custom_call.1} parent=1 // loop_header_branch
      %18 = sbr.rel (%p16) target = $region8
    $region5: #{tpu_custom_call.1} parent=1 // loop_body
      %s20 = ssub.s32 %s15, 1
      %s21 = ssub.s32 %s15, 2
      %s22 = sadd.s32 %s15, 1
      %s23 = ssub.s32 %s15, %s22
      %p24 = scmp.eq.s32.totalorder %s23, 0
      %s26 = sadd.s32 %s25, 1
      %s27 = scalar_select %p24, %s25, %s26
      %p30 = pneg %p24
      %p31 = scmp.eq.s32.totalorder %s15, 1
      %p32 = por %p30, %p31
      %p33 = scmp.ne.s32.totalorder %s25, %s28
      %p34 = scmp.eq.s32.totalorder %s15, 0
      %p35 = por %p33, %p34
      %p36 = scmp.ne.s32.totalorder %s25, %s28
      %p37 = scmp.eq.s32.totalorder %s20, 1
      %p38 = por %p36, %p37
      %p39 = scmp.ne.s32.totalorder %s28, %s29
      %p40 = scmp.eq.s32.totalorder %s20, 0
      %p41 = por %p39, %p40
      %p42 = scmp.ne.s32.totalorder %s28, %s29
      %p43 = scmp.eq.s32.totalorder %s21, 1
      %p44 = por %p42, %p43
      %p46 = scmp.ne.s32.totalorder %s29, %s45
      %p47 = scmp.eq.s32.totalorder %s21, 0
      %p48 = por %p46, %p47
      %s50 = sadd.s32 %s49, 1
      %p53 = scmp.eq.s32.totalorder %s15, 1
      %p54 = scmp.ne.s32.totalorder %s49, %s51
      %p55 = scmp.eq.s32.totalorder %s15, 0
      %p56 = por %p54, %p55
      %p57 = scmp.ne.s32.totalorder %s49, %s51
      %p58 = scmp.eq.s32.totalorder %s20, 1
      %p59 = por %p57, %p58
      %p60 = scmp.ne.s32.totalorder %s51, %s52
      %p61 = scmp.eq.s32.totalorder %s20, 0
      %p62 = por %p60, %p61
      %p63 = scmp.ne.s32.totalorder %s51, %s52
      %p64 = scmp.eq.s32.totalorder %s21, 1
      %p65 = por %p63, %p64
      %p67 = scmp.ne.s32.totalorder %s52, %s66
      %p68 = scmp.eq.s32.totalorder %s21, 0
      %p69 = por %p67, %p68
      %s71 = sadd.s32 %s70, 1
      %p74 = scmp.eq.s32.totalorder %s15, 1
      %p75 = scmp.ne.s32.totalorder %s70, %s72
      %p76 = scmp.eq.s32.totalorder %s15, 0
      %p77 = por %p75, %p76
      %p78 = scmp.ne.s32.totalorder %s70, %s72
      %p79 = scmp.eq.s32.totalorder %s20, 1
      %p80 = por %p78, %p79
      %p81 = scmp.ne.s32.totalorder %s72, %s73
      %p82 = scmp.eq.s32.totalorder %s20, 0
      %p83 = por %p81, %p82
      %p84 = scmp.ne.s32.totalorder %s72, %s73
      %p85 = scmp.eq.s32.totalorder %s21, 1
      %p86 = por %p84, %p85
      %p88 = scmp.ne.s32.totalorder %s73, %s87
      %p89 = scmp.eq.s32.totalorder %s21, 0
      %p90 = por %p88, %p89
      %s91 = ssub.s32 %s15, %s22
      %p92 = scmp.eq.s32.totalorder %s91, 0
      %s94 = sadd.s32 %s93, 1
      %s95 = scalar_select %p92, %s93, %s94
      %p98 = pneg %p92
      %p99 = scmp.eq.s32.totalorder %s15, 1
      %p100 = por %p98, %p99
      %p101 = scmp.ne.s32.totalorder %s93, %s96
      %p102 = scmp.eq.s32.totalorder %s15, 0
      %p103 = por %p101, %p102
      %p104 = scmp.ne.s32.totalorder %s93, %s96
      %p105 = scmp.eq.s32.totalorder %s20, 1
      %p106 = por %p104, %p105
      %p107 = scmp.ne.s32.totalorder %s96, %s97
      %p108 = scmp.eq.s32.totalorder %s20, 0
      %p109 = por %p107, %p108
      %p110 = scmp.ne.s32.totalorder %s96, %s97
      %p111 = scmp.eq.s32.totalorder %s21, 1
      %p112 = por %p110, %p111
      %p114 = scmp.ne.s32.totalorder %s97, %s113
      %p115 = scmp.eq.s32.totalorder %s21, 0
      %p116 = por %p114, %p115
      %p117 = scmp.le.s32.totalorder 1, %s15
      %p118 = scmp.lt.s32.totalorder %s15, 3
      %p119 = pnand %p117, %p118
      %p120 = pneg %p119
      // Predicated region
      $region9: #{tpu_custom_call.1} parent=5 // pred_check
        _
      $region10: #{tpu_custom_call.1} parent=5 // pred_check_branch
        %122 = sbr.rel (%p119) target = $region12
      $region11: #{tpu_custom_call.1} parent=5 // pred_region
        %s123 = ssub.s32 %s15, 1
        // Predicated region
        $region13: #{tpu_custom_call.1} parent=11 // pred_check
          %p124 = pneg %p62
        $region14: #{tpu_custom_call.1} parent=11 // pred_check_branch
          %126 = sbr.rel (%p124) target = $region16
        $region15: #{tpu_custom_call.1} parent=11 // pred_region
          _
        $region16: #{tpu_custom_call.1} parent=11 // pred_fallthru
          _
        // Predicated region
        $region17: #{tpu_custom_call.1} parent=11 // pred_check
          %p127 = pneg %p83
        $region18: #{tpu_custom_call.1} parent=11 // pred_check_branch
          %129 = sbr.rel (%p127) target = $region20
        $region19: #{tpu_custom_call.1} parent=11 // pred_region
          _
        $region20: #{tpu_custom_call.1} parent=11 // pred_fallthru
          _
      $region12: #{tpu_custom_call.1} parent=5 // pred_fallthru
        _
      %p130 = scmp.lt.s32.totalorder %s15, 2
      // Predicated region
      $region21: #{tpu_custom_call.1} parent=5 // pred_check
        %p131 = pneg %p130
      $region22: #{tpu_custom_call.1} parent=5 // pred_check_branch
        %133 = sbr.rel (%p131) target = $region24
      $region23: #{tpu_custom_call.1} parent=5 // pred_region
        // Predicated region
        $region25: #{tpu_custom_call.1} parent=23 // pred_check
          %p134 = pneg %p35
        $region26: #{tpu_custom_call.1} parent=23 // pred_check_branch
          %136 = sbr.rel (%p134) target = $region28
        $region27: #{tpu_custom_call.1} parent=23 // pred_region
          %s137 = sand.u32 %s25, 1
          %s138 = scalar_lea.sflag [#allocation3], %s137
          %s139 = sand.u32 %s25, 1
          %s140 = smul.addr %s139, 16
          %s141 = scalar_lea.vmem [#allocation2], %s140
          %143 = vsyncadd %s138, 0
          %s144 = smul.addr %s15, 2
          %s145 = smul.addr %s144, 8
          %s146 = scalar_lea.hbm %s0, %s145
          %s148 = sshll.u32 %s146, 4
          %s149 = int_to_ptr.hbm [resolvable:$true] %s148
          %s150 = sshll.u32 %s141, 4
          %s151 = int_to_ptr.vmem [resolvable:$true] %s150
          %153 = dma.hbm_to_vmem [thread:$0]  %s149, 256, %s151, %s138
        $region28: #{tpu_custom_call.1} parent=23 // pred_fallthru
          _
      $region24: #{tpu_custom_call.1} parent=5 // pred_fallthru
        _
      %p154 = scmp.le.s32.totalorder 1, %s15
      %p155 = scmp.lt.s32.totalorder %s15, 3
      %p156 = pnand %p154, %p155
      %p157 = pneg %p156
      // Predicated region
      $region29: #{tpu_custom_call.1} parent=5 // pred_check
        _
      $region30: #{tpu_custom_call.1} parent=5 // pred_check_branch
        %159 = sbr.rel (%p156) target = $region32
      $region31: #{tpu_custom_call.1} parent=5 // pred_region
        %s160 = ssub.s32 %s15, 1
        %s161 = sand.u32 %s28, 1
        %s162 = scalar_lea.sflag [#allocation3], %s161
        %s163 = sand.u32 %s28, 1
        %s164 = smul.addr %s163, 16
        %s165 = scalar_lea.vmem [#allocation2], %s164
        // Predicated region
        $region33: #{tpu_custom_call.1} parent=31 // pred_check
          %p166 = pneg %p41
        $region34: #{tpu_custom_call.1} parent=31 // pred_check_branch
          %168 = sbr.rel (%p166) target = $region36
        $region35: #{tpu_custom_call.1} parent=31 // pred_region
          %170 = dma.done %s162, 256
        $region36: #{tpu_custom_call.1} parent=31 // pred_fallthru
          _
        %s171 = sand.u32 %s28, 1
        %s172 = scalar_lea.sflag [#allocation3], %s171
        %s173 = sand.u32 %s28, 1
        %s174 = smul.addr %s173, 16
        %s175 = scalar_lea.vmem [#allocation2], %s174
        %p176 = pneg %p41
        %p177 = pneg %p38
        %p178 = pneg %p62
        %p179 = pneg %p59
        %p180 = pneg %p83
        %p181 = pneg %p80
        %p182 = pneg %p109
        %p183 = pneg %p106
        %s184 = sand.u32 %s96, 1
        %s185 = scalar_lea.sflag [#allocation4], %s184
        %s186 = sand.u32 %s96, 1
        %s187 = smul.addr %s186, 16
        %s188 = scalar_lea.vmem [#allocation5], %s187
        %v189 = vld [vmem:[%s165] sm:$0xff]
        %v190 = vld [vmem:[%s165 + $0x8] sm:$0xff]
        %v191 = vadd.f32 %v189, %v190
        %192 = vadd.xlane.f32.xlu0 %v191
        %v193 = vpop.xlane.xlu0 %192
        %v194 = vmul.f32 %v193, 0.00390625
        %v195 = vld [vmem:[%s1] sm:$0x3]
        %v196 = vld [vmem:[%s2] sm:$0xff]
        %v198 = vperm.slane %v195, 0
        %v199 = vlaneseq
        %v200 = vshrl.u32 %v199, 7
        %202 = vset.pattern.permute.xlu0 %v200
        %203 = vperm.xlu0 %202, %v198
        %v204 = vpop.permute.xlu0 %203
        %v205 = vperm.slane %v195, 1
        %v206 = vlaneseq
        %v207 = vshrl.u32 %v206, 7
        %209 = vset.pattern.permute.xlu0 %v207
        %210 = vperm.xlu0 %209, %v205
        %v211 = vpop.permute.xlu0 %210
        %v214 = vmul.f32 %v194, %v204
        %v215 = vmul.f32 %v194, %v211
        %218 = vset.pattern.permute.xlu0 0
        %219 = vperm.xlu0 %218, %v214
        %v220 = vpop.permute.xlu0 %219
        %221 = vset.pattern.permute.xlu0 0
        %222 = vperm.xlu0 %221, %v215
        %v223 = vpop.permute.xlu0 %222
        %v224 = vlaneseq
        %v225 = vand.u32 %v224, 127
        %v226 = vperm.slane %v220, %v225
        %v227 = vperm.slane %v223, %v225
        %vm228 = vcmask 1041409
        %v229 = vsel %vm228, %v227, %v226
        %vm231 = vcmask 58368
        %v232 = vsel %vm231, %v229, 0.0
        %233 = vadd.xlane.f32.xlu0 %v232
        %v234 = vpop.xlane.xlu0 %233
        %v235 = vmax.f32 %v234, 0.0
        %v237 = vperm.slane %v196, 0
        %v238 = vlaneseq
        %v239 = vshrl.u32 %v238, 7
        %241 = vset.pattern.permute.xlu0 %v239
        %242 = vperm.xlu0 %241, %v237
        %v243 = vpop.permute.xlu0 %242
        %v244 = vperm.slane %v196, 1
        %v245 = vlaneseq
        %v246 = vshrl.u32 %v245, 7
        %248 = vset.pattern.permute.xlu0 %v246
        %249 = vperm.xlu0 %248, %v244
        %v250 = vpop.permute.xlu0 %249
        %v251 = vperm.slane %v196, 2
        %v252 = vlaneseq
        %v253 = vshrl.u32 %v252, 7
        %255 = vset.pattern.permute.xlu0 %v253
        %256 = vperm.xlu0 %255, %v251
        %v257 = vpop.permute.xlu0 %256
        %v258 = vperm.slane %v196, 3
        %v259 = vlaneseq
        %v260 = vshrl.u32 %v259, 7
        %262 = vset.pattern.permute.xlu0 %v260
        %263 = vperm.xlu0 %262, %v258
        %v264 = vpop.permute.xlu0 %263
        %v265 = vperm.slane %v196, 4
        %v266 = vlaneseq
        %v267 = vshrl.u32 %v266, 7
        %269 = vset.pattern.permute.xlu0 %v267
        %270 = vperm.xlu0 %269, %v265
        %v271 = vpop.permute.xlu0 %270
        %v272 = vperm.slane %v196, 5
        %v273 = vlaneseq
        %v274 = vshrl.u32 %v273, 7
        %276 = vset.pattern.permute.xlu0 %v274
        %277 = vperm.xlu0 %276, %v272
        %v278 = vpop.permute.xlu0 %277
        %v279 = vperm.slane %v196, 6
        %v280 = vlaneseq
        %v281 = vshrl.u32 %v280, 7
        %283 = vset.pattern.permute.xlu0 %v281
        %284 = vperm.xlu0 %283, %v279
        %v285 = vpop.permute.xlu0 %284
        %v286 = vperm.slane %v196, 7
        %v287 = vlaneseq
        %v288 = vshrl.u32 %v287, 7
        %290 = vset.pattern.permute.xlu0 %v288
        %291 = vperm.xlu0 %290, %v286
        %v292 = vpop.permute.xlu0 %291
        %v301 = vmul.f32 %v235, %v243
        %v302 = vmul.f32 %v235, %v250
        %v303 = vmul.f32 %v235, %v257
        %v304 = vmul.f32 %v235, %v264
        %v305 = vmul.f32 %v235, %v271
        %v306 = vmul.f32 %v235, %v278
        %v307 = vmul.f32 %v235, %v285
        %v308 = vmul.f32 %v235, %v292
        %317 = vset.pattern.permute.xlu0 0
        %318 = vperm.xlu0 %317, %v301
        %v319 = vpop.permute.xlu0 %318
        %320 = vset.pattern.permute.xlu0 0
        %321 = vperm.xlu0 %320, %v302
        %v322 = vpop.permute.xlu0 %321
        %323 = vset.pattern.permute.xlu0 0
        %324 = vperm.xlu0 %323, %v303
        %v325 = vpop.permute.xlu0 %324
        %326 = vset.pattern.permute.xlu0 0
        %327 = vperm.xlu0 %326, %v304
        %v328 = vpop.permute.xlu0 %327
        %329 = vset.pattern.permute.xlu0 0
        %330 = vperm.xlu0 %329, %v305
        %v331 = vpop.permute.xlu0 %330
        %332 = vset.pattern.permute.xlu0 0
        %333 = vperm.xlu0 %332, %v306
        %v334 = vpop.permute.xlu0 %333
        %335 = vset.pattern.permute.xlu0 0
        %336 = vperm.xlu0 %335, %v307
        %v337 = vpop.permute.xlu0 %336
        %338 = vset.pattern.permute.xlu0 0
        %339 = vperm.xlu0 %338, %v308
        %v340 = vpop.permute.xlu0 %339
        %v341 = vperm.slane %v319, %v225
        %v342 = vperm.slane %v322, %v225
        %v343 = vperm.slane %v325, %v225
        %v344 = vperm.slane %v328, %v225
        %v345 = vperm.slane %v331, %v225
        %v346 = vperm.slane %v334, %v225
        %v347 = vperm.slane %v337, %v225
        %v348 = vperm.slane %v340, %v225
        %v349 = vsel %vm228, %v342, %v341
        %vm350 = vcmask 1042434
        %v351 = vsel %vm350, %v343, %v349
        %vm352 = vcmask 1043459
        %v353 = vsel %vm352, %v344, %v351
        %vm354 = vcmask 1044484
        %v355 = vsel %vm354, %v345, %v353
        %vm356 = vcmask 1045509
        %v357 = vsel %vm356, %v346, %v355
        %vm358 = vcmask 1046534
        %v359 = vsel %vm358, %v347, %v357
        %vm360 = vcmask 1047559
        %v361 = vsel %vm360, %v348, %v359
        %vm363 = vcmask 15360
        %v364 = vsel %vm363, %v361, 0.0
        %365 = vadd.xlane.f32.xlu0 %v364
        %v366 = vpop.xlane.xlu0 %365
        %v367 = vadd.f32 %v366, 3.0
        %v368 = vmax.f32 %v367, 0.0
        %v369 = vmin.f32 %v368, 6.0
        %v370 = vmul.f32 %v369, 0.16666667
        %v371 = vmul.f32 %v189, %v370
        %v372 = vmul.f32 %v190, %v370
        %373 = vst [vmem:[%s188] sm:$0xff] %v371
        %374 = vst [vmem:[%s188 + $0x8] sm:$0xff] %v372
        %s375 = sand.u32 %s96, 1
        %s376 = scalar_lea.sflag [#allocation4], %s375
        %s377 = sand.u32 %s96, 1
        %s378 = smul.addr %s377, 16
        %s379 = scalar_lea.vmem [#allocation5], %s378
        // Predicated region
        $region37: #{tpu_custom_call.1} parent=31 // pred_check
          %p380 = pneg %p106
        $region38: #{tpu_custom_call.1} parent=31 // pred_check_branch
          %382 = sbr.rel (%p380) target = $region40
        $region39: #{tpu_custom_call.1} parent=31 // pred_region
          %384 = vsyncadd %s376, 0
          %s385 = smul.addr %s20, 2
          %s386 = smul.addr %s385, 8
          %s387 = scalar_lea.hbm %s3, %s386
          %s389 = sshll.u32 %s379, 4
          %s390 = int_to_ptr.vmem [resolvable:$true] %s389
          %s391 = sshll.u32 %s387, 4
          %s392 = int_to_ptr.hbm [resolvable:$true] %s391
          %394 = dma.vmem_to_hbm [thread:$0]  %s390, 256, %s392, %s376
        $region40: #{tpu_custom_call.1} parent=31 // pred_fallthru
          _
      $region32: #{tpu_custom_call.1} parent=5 // pred_fallthru
        _
      %p395 = scmp.le.s32.totalorder 2, %s15
      // Predicated region
      $region41: #{tpu_custom_call.1} parent=5 // pred_check
        %p396 = pneg %p395
      $region42: #{tpu_custom_call.1} parent=5 // pred_check_branch
        %398 = sbr.rel (%p396) target = $region44
      $region43: #{tpu_custom_call.1} parent=5 // pred_region
        %s399 = ssub.s32 %s15, 2
        // Predicated region
        $region45: #{tpu_custom_call.1} parent=43 // pred_check
          %p400 = pneg %p112
        $region46: #{tpu_custom_call.1} parent=43 // pred_check_branch
          %402 = sbr.rel (%p400) target = $region48
        $region47: #{tpu_custom_call.1} parent=43 // pred_region
          %s403 = sand.u32 %s97, 1
          %s404 = scalar_lea.sflag [#allocation4], %s403
          %s405 = sand.u32 %s97, 1
          %s406 = smul.addr %s405, 16
          %s407 = scalar_lea.vmem [#allocation5], %s406
          %409 = dma.done %s404, 256
        $region48: #{tpu_custom_call.1} parent=43 // pred_fallthru
          _
      $region44: #{tpu_custom_call.1} parent=5 // pred_fallthru
        _
    $region6: #{tpu_custom_call.1} parent=1 // loop_footer
      %s19 = sadd.s32 1, %s15
    $region7: #{tpu_custom_call.1} parent=1 // loop_footer_branch
      %14 = sbr.rel target = $region3
    $region8: #{tpu_custom_call.1} parent=1 // loop_exit
      _
    %410 = vsyncpa [#allocation3], 1
    %s411 = scalar_lea.sflag [#allocation3], 1
    %412 = vsyncpa %s411, 1
    %413 = vsyncpa [#allocation4], 1
    %s414 = scalar_lea.sflag [#allocation4], 1
    %415 = vsyncpa %s414, 1

</llo_original>
